<compile_context>
chip_gen: v5e
topology: v5e:2x2
jax: 0.10.0
libtpu: 0.0.40
codegen_flags: <defaults>
</compile_context>

<pallas_src>
import functools

import jax
import jax.numpy as jnp
from jax.experimental import pallas as pl
from jax.experimental.pallas import tpu as pltpu


def _linear_kernel(x_ref, w_ref, b_ref, o_ref):
    # x_ref: (TB, H)  w_ref: (H, Lpad)  b_ref: (1, Lpad)  o_ref: (TB, Lpad)
    acc = jnp.dot(x_ref[...], w_ref[...], preferred_element_type=jnp.float32)
    acc = acc + b_ref[...].astype(jnp.float32)  # bias broadcast over batch rows
    o_ref[...] = acc.astype(o_ref.dtype)


def _round_up(x, m):
    return ((x + m - 1) // m) * m


def _pick_batch_tile(batch, hidden, dtype):
    """Pick a batch tile: sublane-aligned, VMEM-safe, not larger than needed."""
    dsize = jnp.dtype(dtype).itemsize
    sublane = {1: 32, 2: 16, 4: 8}.get(dsize, 8)
    # Keep each x tile <= ~4 MiB so 2-3x buffering fits comfortably under the
    # scoped VMEM default on all chips (16 MiB v5e / 32 MiB v6e / v7x).
    budget_bytes = 4 * 1024 * 1024
    tb = min(1024, max(sublane, budget_bytes // max(1, hidden * dsize)))
    tb = max(sublane, (tb // sublane) * sublane)
    # Don't tile beyond the (sublane-padded) batch.
    tb = min(tb, _round_up(batch, sublane))
    return tb


@functools.partial(jax.jit, static_argnames=())
def classification_head(output, weight, bias):
    """output: (B, H), weight: (L, H), bias: (L,) -> logits (B, L)."""
    B, H = output.shape
    L, Hw = weight.shape
    assert H == Hw
    dtype = output.dtype
    dsize = jnp.dtype(dtype).itemsize

    # Lane-dense output: pad num_labels up to a multiple of 128.
    Lpad = _round_up(max(L, 128), 128)
    # Pre-transpose + zero-pad the weight once in the wrapper: (L, H) -> (H, Lpad).
    w_t = jnp.zeros((H, Lpad), dtype=weight.dtype).at[:, :L].set(weight.T)
    b_p = jnp.zeros((1, Lpad), dtype=bias.dtype).at[:, :L].set(bias)

    # Batch tiling (pad B so TB divides it; padded rows sliced off below).
    TB = _pick_batch_tile(B, H, dtype)
    B_pad = _round_up(B, TB)
    x_p = output
    if B_pad != B:
        x_p = jnp.zeros((B_pad, H), dtype=dtype).at[:B].set(output)

    num_tiles = B_pad // TB

    # Deeper input buffering only pays off (and is only legal to exercise) with a
    # reasonably deep grid; the op is HBM-bound so keep the x DMA queue full.
    if num_tiles >= 3:
        x_spec = pl.BlockSpec((TB, H), lambda i: (i, 0),
                              pipeline_mode=pl.Buffered(3))
    else:
        x_spec = pl.BlockSpec((TB, H), lambda i: (i, 0))

    cost = pl.CostEstimate(
        flops=2 * B_pad * H * Lpad,
        transcendentals=0,
        bytes_accessed=(B_pad * H + H * Lpad + Lpad + B_pad * Lpad) * dsize,
    )

    logits_padded = pl.pallas_call(
        _linear_kernel,
        out_shape=jax.ShapeDtypeStruct((B_pad, Lpad), dtype),
        grid_spec=pltpu.PrefetchScalarGridSpec(
            num_scalar_prefetch=0,
            grid=(num_tiles,),
            in_specs=[
                x_spec,                                        # streamed x tiles
                pl.BlockSpec((H, Lpad), lambda i: (0, 0)),     # resident weight
                pl.BlockSpec((1, Lpad), lambda i: (0, 0)),     # resident bias
            ],
            out_specs=pl.BlockSpec((TB, Lpad), lambda i: (i, 0)),
        ),
        compiler_params=pltpu.CompilerParams(
            dimension_semantics=("parallel",),
        ),
        cost_estimate=cost,
    )(x_p, w_t, b_p)

    # Drop batch padding and label padding.
    return logits_padded[:B, :L]


if __name__ == "__main__":
    # Small shapes consistent with the module: pooled BERT output (batch, hidden).
    batch, hidden_size, num_labels = 8, 32, 4

    key = jax.random.PRNGKey(0)
    kx, kw, kb = jax.random.split(key, 3)

    # Deterministic parameter init (matches nn.Linear shapes: W (L, H), b (L,)).
    x = jax.random.normal(kx, (batch, hidden_size), dtype=jnp.float32)
    w = jax.random.normal(kw, (num_labels, hidden_size), dtype=jnp.float32) * 0.02
    b = jax.random.normal(kb, (num_labels,), dtype=jnp.float32) * 0.02

    logits = classification_head(x, w, b)
    jax.block_until_ready(logits)

    # Correctness check against plain JAX reference.
    ref = x @ w.T + b
    assert logits.shape == (batch, num_labels)
    assert jnp.allclose(logits, ref, atol=1e-5, rtol=1e-5)

    print("KERNEL_OK")
</pallas_src>

<mosaic_0001>
module attributes {stable_mosaic.version = 11 : i64} {
  func.func @_linear_kernel(%arg0: i32, %arg1: memref<8x32xf32, #tpu.memory_space<vmem>>, %arg2: memref<32x128xf32, #tpu.memory_space<vmem>>, %arg3: memref<1x128xf32, #tpu.memory_space<vmem>>, %arg4: memref<8x128xf32, #tpu.memory_space<vmem>>) attributes {dimension_semantics = [#tpu.dimension_semantics<parallel>], iteration_bounds = array<i64: 1>, scalar_prefetch = 0 : i64, scratch_operands = 0 : i64, tpu.core_type = #tpu.core_type<tc>, window_params = [{transform_indices = @transform_0, window_bounds = array<i64: 8, 32>}, {pipeline_mode = #tpu.pipeline_mode<synchronous>, transform_indices = @transform_1, window_bounds = array<i64: 32, 128>}, {pipeline_mode = #tpu.pipeline_mode<synchronous>, transform_indices = @transform_2, window_bounds = array<i64: 1, 128>}, {transform_indices = @transform_3, window_bounds = array<i64: 8, 128>}]} {
    %c0 = arith.constant 0 : index
    %c0_0 = arith.constant 0 : index
    %0 = vector.load %arg1[%c0, %c0_0] : memref<8x32xf32, #tpu.memory_space<vmem>>, vector<8x32xf32>
    %c0_1 = arith.constant 0 : index
    %c0_2 = arith.constant 0 : index
    %1 = vector.load %arg2[%c0_1, %c0_2] : memref<32x128xf32, #tpu.memory_space<vmem>>, vector<32x128xf32>
    %cst = arith.constant dense<0.000000e+00> : vector<8x128xf32>
    %2 = tpu.matmul %0, %1, %cst {dimension_numbers = #tpu.dot_dimension_numbers<[1], [0], [0], [1], [0, 0, 1, 1], [], []>} : vector<8x32xf32>, vector<32x128xf32>, vector<8x128xf32> -> vector<8x128xf32>
    %c0_3 = arith.constant 0 : index
    %c0_4 = arith.constant 0 : index
    %3 = vector.load %arg3[%c0_3, %c0_4] : memref<1x128xf32, #tpu.memory_space<vmem>>, vector<1x128xf32>
    %4 = vector.broadcast %3 : vector<1x128xf32> to vector<8x128xf32>
    %5 = arith.addf %2, %4 : vector<8x128xf32>
    %c0_5 = arith.constant 0 : index
    %c0_6 = arith.constant 0 : index
    %6 = vector.load %arg4[%c0_5, %c0_6] : memref<8x128xf32, #tpu.memory_space<vmem>>, vector<8x128xf32>
    tpu.vector_store %arg4[%c0_5, %c0_6], %5 {strides = array<i32>} : memref<8x128xf32, #tpu.memory_space<vmem>>, vector<8x128xf32>,
    return
  }
  func.func @transform_0(%arg0: i32) -> (i32, i32) {
    %c0_i32 = arith.constant 0 : i32
    %c0_i32_0 = arith.constant 0 : i32
    return %arg0, %c0_i32 : i32, i32
  }
  func.func @transform_1(%arg0: i32) -> (i32, i32) {
    %c0_i32 = arith.constant 0 : i32
    %c0_i32_0 = arith.constant 0 : i32
    %c0_i32_1 = arith.constant 0 : i32
    return %c0_i32, %c0_i32_0 : i32, i32
  }
  func.func @transform_2(%arg0: i32) -> (i32, i32) {
    %c0_i32 = arith.constant 0 : i32
    %c0_i32_0 = arith.constant 0 : i32
    %c0_i32_1 = arith.constant 0 : i32
    return %c0_i32, %c0_i32_0 : i32, i32
  }
  func.func @transform_3(%arg0: i32) -> (i32, i32) {
    %c0_i32 = arith.constant 0 : i32
    %c0_i32_0 = arith.constant 0 : i32
    return %arg0, %c0_i32 : i32, i32
  }
}

</mosaic_0001>

<llo_original>
// kernel: classification_head.1
$region0: #{classification_head.1}
  #allocation0 [shape = 'u32[]', space=smem, size = 0x4, offset = 0x4, fixed_abs, tag = 'smem constant byte address 0x4 - core index']
  #allocation1 [shape = 'u32[72,128]{1,0:T(1,128)}', space=vmem, size = 0x9000, scoped, tag = 'internal scratch']
  %s0 = inlined_call_operand.vmem [shape: f32[8,32], index: 0, kind: input, shape index: {}]
  %s1 = inlined_call_operand.vmem [shape: f32[32,128], index: 1, kind: input, shape index: {}]
  %s2 = inlined_call_operand.vmem [shape: f32[1,128], index: 2, kind: input, shape index: {}]
  %s3 = inlined_call_operand.vmem [shape: f32[8,128], index: 3, kind: output, shape index: {}]
  %s4 = sld [smem:[#allocation0]]
  $region22: #{classification_head.1} parent=0
    _
  %s6 = ssub.s32 1, %s4
  %s7 = scalar_select 0, %s6, %s4
  // Predicated region
  $region2: #{classification_head.1} parent=0 // pred_check
    _
  $region3: #{classification_head.1} parent=0 // pred_check_branch
    %9 = sbr.rel (0) target = $region5
  $region4: #{classification_head.1} parent=0 // pred_region
    _
  $region5: #{classification_head.1} parent=0 // pred_fallthru
    _
  // Predicated region
  $region6: #{classification_head.1} parent=0 // pred_check
    _
  $region7: #{classification_head.1} parent=0 // pred_check_branch
    %11 = sbr.rel (0) target = $region9
  $region8: #{classification_head.1} parent=0 // pred_region
    _
  $region9: #{classification_head.1} parent=0 // pred_fallthru
    _
  // Predicated region
  $region10: #{classification_head.1} parent=0 // pred_check
    _
  $region11: #{classification_head.1} parent=0 // pred_check_branch
    %13 = sbr.rel (0) target = $region13
  $region12: #{classification_head.1} parent=0 // pred_region
    _
  $region13: #{classification_head.1} parent=0 // pred_fallthru
    _
  %v14 = vld [vmem:[%s0] sm:$0xff]
  %v15 = vld [vmem:[%s1] sm:$0xff]
  %v16 = vld [vmem:[%s1 + $0x8] sm:$0xff]
  %v17 = vld [vmem:[%s1 + $0x10] sm:$0xff]
  %v18 = vld [vmem:[%s1 + $0x18] sm:$0xff]
  %v19 = vld [vmem:[%s2] sm:$0x1]
  %v21 = vperm.slane %v19, 0
  %vm23 = vcmask 261120
  %v25 = vsel %vm23, %v14, 0
  %27 = vmatpush.msra.mxu0 0.0
  %28 = vmatpush.msra.mxu0 0.0
  %29 = vmatpush.msra.mxu0 0.0
  %30 = vmatpush.msra.mxu0 0.0
  %31 = vmatpush.msra.mxu0 0.0
  %32 = vmatpush.msra.mxu0 0.0
  %33 = vmatpush.msra.mxu0 0.0
  %34 = vmatpush.msra.mxu0 0.0
  %35 = vmatpush.msra.mxu0 0.0
  %36 = vmatpush.msra.mxu0 0.0
  %37 = vmatpush.msra.mxu0 0.0
  %38 = vmatpush.msra.mxu0 0.0
  %39 = vmatpush.msra.mxu0 %v18
  %40 = vmatpush.msra.mxu0 %v17
  %41 = vmatpush.msra.mxu0 %v16
  %42 = vmatpush.msra.mxu0 %v15
  %43 = vmatmul.f32.gmra.mxu0 %v25
  %v44 = vpop.f32.mrf.mxu0
  %v45 = vadd.f32 %v21, %v44
  %46 = vdwg.mxu0
  %47 = vst [vmem:[%s3] sm:$0xff] %v45
  // Predicated region
  $region14: #{classification_head.1} parent=0 // pred_check
    _
  $region15: #{classification_head.1} parent=0 // pred_check_branch
    %49 = sbr.rel (0) target = $region17
  $region16: #{classification_head.1} parent=0 // pred_region
    _
  $region17: #{classification_head.1} parent=0 // pred_fallthru
    _
  // Predicated region
  $region18: #{classification_head.1} parent=0 // pred_check
    _
  $region19: #{classification_head.1} parent=0 // pred_check_branch
    %51 = sbr.rel (0) target = $region21
  $region20: #{classification_head.1} parent=0 // pred_region
    _
  $region21: #{classification_head.1} parent=0 // pred_fallthru
    _

</llo_original>
